<compile_context>
chip_gen: v6e
topology: v6e:2x2x1
jax: 0.10.0
libtpu: 0.0.40
codegen_flags: <defaults>
</compile_context>

<pallas_src>
import functools
import math

import jax
import jax.numpy as jnp
from jax import lax
from jax.experimental import pallas as pl
from jax.experimental.pallas import tpu as pltpu

LN_EPS = 1e-12                    # HF BertConfig layer_norm_eps default
_VMEM_LIMIT = 48 * 1024 * 1024    # safe on v5e/v6e (128 MiB) and v7x (64 MiB)


def _cparams(*sem):
    return pltpu.CompilerParams(dimension_semantics=sem,
                                vmem_limit_bytes=_VMEM_LIMIT)


def _row_tile(n, cap=256):
    """Largest multiple-of-8 divisor of n that is <= cap (falls back to n)."""
    if n <= cap:
        return n
    t = (cap // 8) * 8
    while t > 8 and n % t:
        t -= 8
    return t if (t > 0 and n % t == 0) else n


def _col_tile(n, cap=512):
    """Largest multiple-of-128 divisor of n that is <= cap (falls back to n)."""
    if n <= cap:
        return n
    t = (cap // 128) * 128
    while t >= 128 and n % t:
        t -= 128
    return t if (t >= 128 and n % t == 0) else n


def _gelu(x):
    # HF BERT default hidden_act="gelu" (exact, erf-based); computed in f32.
    return 0.5 * x * (1.0 + lax.erf(x * 0.7071067811865476))


def _ln(y_f32, g, b):
    mu = jnp.mean(y_f32, axis=-1, keepdims=True)
    var = jnp.mean(jnp.square(y_f32 - mu), axis=-1, keepdims=True)
    return (y_f32 - mu) * lax.rsqrt(var + LN_EPS) * g + b


# ----------------------------- Pallas kernels -----------------------------

def _dense_kernel(x_ref, w_ref, b_ref, o_ref, *, activation):
    y = jnp.dot(x_ref[...], w_ref[...], preferred_element_type=jnp.float32)
    y = y + b_ref[...]
    if activation == "gelu":
        y = _gelu(y)
    o_ref[...] = y.astype(o_ref.dtype)


def dense(x, w, b, activation=None, tm_cap=512, tn_cap=512):
    """y = activation(x @ w + b); x: [T, H] bf16, w: [H, N] bf16, b: [N] f32."""
    T, H = x.shape
    N = w.shape[1]
    tm = _row_tile(T, tm_cap)
    tn = _col_tile(N, tn_cap)
    return pl.pallas_call(
        functools.partial(_dense_kernel, activation=activation),
        out_shape=jax.ShapeDtypeStruct((T, N), x.dtype),
        grid_spec=pltpu.PrefetchScalarGridSpec(
            num_scalar_prefetch=0,
            grid=(T // tm, N // tn),
            in_specs=[
                pl.BlockSpec((tm, H), lambda i, j: (i, 0)),
                pl.BlockSpec((H, tn), lambda i, j: (0, j)),
                pl.BlockSpec((1, tn), lambda i, j: (0, j)),
            ],
            out_specs=pl.BlockSpec((tm, tn), lambda i, j: (i, j)),
        ),
        compiler_params=_cparams("parallel", "parallel"),
    )(x, w, b.reshape(1, N))


def _dense_add_ln_kernel(x_ref, r_ref, w_ref, b_ref, g_ref, bt_ref, o_ref):
    # BertSelfOutput: LayerNorm(x @ W + b + residual)
    y = jnp.dot(x_ref[...], w_ref[...], preferred_element_type=jnp.float32)
    y = y + b_ref[...] + r_ref[...].astype(jnp.float32)
    o_ref[...] = _ln(y, g_ref[...], bt_ref[...]).astype(o_ref.dtype)


def dense_add_ln(x, residual, w, b, gamma, beta, tm_cap=256):
    T, Hin = x.shape
    Hout = w.shape[1]
    tm = _row_tile(T, tm_cap)
    return pl.pallas_call(
        _dense_add_ln_kernel,
        out_shape=jax.ShapeDtypeStruct((T, Hout), residual.dtype),
        grid_spec=pltpu.PrefetchScalarGridSpec(
            num_scalar_prefetch=0,
            grid=(T // tm,),
            in_specs=[
                pl.BlockSpec((tm, Hin), lambda i: (i, 0)),
                pl.BlockSpec((tm, Hout), lambda i: (i, 0)),
                pl.BlockSpec((Hin, Hout), lambda i: (0, 0)),
                pl.BlockSpec((1, Hout), lambda i: (0, 0)),
                pl.BlockSpec((1, Hout), lambda i: (0, 0)),
                pl.BlockSpec((1, Hout), lambda i: (0, 0)),
            ],
            out_specs=pl.BlockSpec((tm, Hout), lambda i: (i, 0)),
        ),
        compiler_params=_cparams("parallel"),
    )(x, residual, w, b.reshape(1, Hout),
      gamma.reshape(1, Hout), beta.reshape(1, Hout))


def _dense_ln_kernel(x_ref, w_ref, b_ref, g_ref, bt_ref, o_ref, *, activation):
    # MLM head transform: LayerNorm(gelu(x @ W + b))
    y = jnp.dot(x_ref[...], w_ref[...], preferred_element_type=jnp.float32)
    y = y + b_ref[...]
    if activation == "gelu":
        y = _gelu(y)
    o_ref[...] = _ln(y, g_ref[...], bt_ref[...]).astype(o_ref.dtype)


def dense_ln(x, w, b, gamma, beta, activation=None, tm_cap=256):
    T, Hin = x.shape
    Hout = w.shape[1]
    tm = _row_tile(T, tm_cap)
    return pl.pallas_call(
        functools.partial(_dense_ln_kernel, activation=activation),
        out_shape=jax.ShapeDtypeStruct((T, Hout), x.dtype),
        grid_spec=pltpu.PrefetchScalarGridSpec(
            num_scalar_prefetch=0,
            grid=(T // tm,),
            in_specs=[
                pl.BlockSpec((tm, Hin), lambda i: (i, 0)),
                pl.BlockSpec((Hin, Hout), lambda i: (0, 0)),
                pl.BlockSpec((1, Hout), lambda i: (0, 0)),
                pl.BlockSpec((1, Hout), lambda i: (0, 0)),
                pl.BlockSpec((1, Hout), lambda i: (0, 0)),
            ],
            out_specs=pl.BlockSpec((tm, Hout), lambda i: (i, 0)),
        ),
        compiler_params=_cparams("parallel"),
    )(x, w, b.reshape(1, Hout), gamma.reshape(1, Hout), beta.reshape(1, Hout))


def _ffn_kernel(x_ref, wi_ref, bi_ref, wo_ref, bo_ref, g_ref, bt_ref, o_ref):
    # BertIntermediate + BertOutput fused:
    #   LayerNorm(gelu(x @ Wi + bi) @ Wo + bo + x)
    x = x_ref[...]
    h = jnp.dot(x, wi_ref[...], preferred_element_type=jnp.float32) + bi_ref[...]
    h = _gelu(h).astype(wo_ref.dtype)
    y = jnp.dot(h, wo_ref[...], preferred_element_type=jnp.float32) + bo_ref[...]
    y = y + x.astype(jnp.float32)
    o_ref[...] = _ln(y, g_ref[...], bt_ref[...]).astype(o_ref.dtype)


def ffn(x, wi, bi, wo, bo, gamma, beta, tm_cap=256):
    T, H = x.shape
    I = wi.shape[1]
    tm = _row_tile(T, tm_cap)
    return pl.pallas_call(
        _ffn_kernel,
        out_shape=jax.ShapeDtypeStruct((T, H), x.dtype),
        grid_spec=pltpu.PrefetchScalarGridSpec(
            num_scalar_prefetch=0,
            grid=(T // tm,),
            in_specs=[
                pl.BlockSpec((tm, H), lambda i: (i, 0)),
                pl.BlockSpec((H, I), lambda i: (0, 0)),
                pl.BlockSpec((1, I), lambda i: (0, 0)),
                pl.BlockSpec((I, H), lambda i: (0, 0)),
                pl.BlockSpec((1, H), lambda i: (0, 0)),
                pl.BlockSpec((1, H), lambda i: (0, 0)),
                pl.BlockSpec((1, H), lambda i: (0, 0)),
            ],
            out_specs=pl.BlockSpec((tm, H), lambda i: (i, 0)),
        ),
        compiler_params=_cparams("parallel"),
    )(x, wi, bi.reshape(1, I), wo, bo.reshape(1, H),
      gamma.reshape(1, H), beta.reshape(1, H))


def _ln_kernel(x_ref, g_ref, b_ref, o_ref):
    o_ref[...] = _ln(x_ref[...].astype(jnp.float32),
                     g_ref[...], b_ref[...]).astype(o_ref.dtype)


def layernorm(x, gamma, beta, out_dtype=None, tm_cap=256):
    T, H = x.shape
    out_dtype = x.dtype if out_dtype is None else out_dtype
    tm = _row_tile(T, tm_cap)
    return pl.pallas_call(
        _ln_kernel,
        out_shape=jax.ShapeDtypeStruct((T, H), out_dtype),
        grid_spec=pltpu.PrefetchScalarGridSpec(
            num_scalar_prefetch=0,
            grid=(T // tm,),
            in_specs=[
                pl.BlockSpec((tm, H), lambda i: (i, 0)),
                pl.BlockSpec((1, H), lambda i: (0, 0)),
                pl.BlockSpec((1, H), lambda i: (0, 0)),
            ],
            out_specs=pl.BlockSpec((tm, H), lambda i: (i, 0)),
        ),
        compiler_params=_cparams("parallel"),
    )(x, gamma.reshape(1, H), beta.reshape(1, H))


def _attn_kernel(qkv_ref, m_ref, o_ref, *, num_heads, scale):
    # One batch element per grid step.
    #   qkv_ref: [S, 3H] bf16 with columns [Q | K | V], each H = num_heads*dH wide
    #   m_ref:   [1, S]  additive mask bias (f32)
    #   o_ref:   [S, H]  context, heads re-packed along the lane (hidden) axis
    qkv = qkv_ref[...]
    S, threeH = qkv.shape
    H = threeH // 3
    dH = H // num_heads
    m = m_ref[...]
    outs = []
    for h in range(num_heads):           # static unroll over heads
        q = qkv[:, h * dH:(h + 1) * dH]
        k = qkv[:, H + h * dH:H + (h + 1) * dH]
        v = qkv[:, 2 * H + h * dH:2 * H + (h + 1) * dH]
        s = lax.dot_general(q, k, (((1,), (1,)), ((), ())),
                            preferred_element_type=jnp.float32) * scale
        s = s + m
        s = s - jnp.max(s, axis=-1, keepdims=True)
        p = jnp.exp(s)
        p = p * pl.reciprocal(jnp.sum(p, axis=-1, keepdims=True), approx=True)
        outs.append(jnp.dot(p.astype(v.dtype), v,
                            preferred_element_type=jnp.float32))
    # Single full-width, lane-dense store of the whole context block.
    o_ref[...] = jnp.concatenate(outs, axis=-1).astype(o_ref.dtype)


def attention(qkv_bsh, mask_bias, num_heads):
    """qkv_bsh: [B, S, 3H] bf16 fused projections; mask_bias: [B, 1, S] f32.

    Returns context in [B, S, H] (tokens-major) so no HBM transposes are needed
    on either side of the kernel.
    """
    B, S, threeH = qkv_bsh.shape
    H = threeH // 3
    dH = H // num_heads
    scale = 1.0 / math.sqrt(dH)
    # TODO(synk): for very long sequences (S*S*4 bytes > VMEM) switch to a
    #             flash-style KV-tiled online softmax; whole-S blocks are used here.
    return pl.pallas_call(
        functools.partial(_attn_kernel, num_heads=num_heads, scale=scale),
        out_shape=jax.ShapeDtypeStruct((B, S, H), qkv_bsh.dtype),
        grid_spec=pltpu.PrefetchScalarGridSpec(
            num_scalar_prefetch=0,
            grid=(B,),
            in_specs=[
                pl.BlockSpec((None, S, threeH), lambda b: (b, 0, 0)),
                pl.BlockSpec((None, 1, S), lambda b: (b, 0, 0)),
            ],
            out_specs=pl.BlockSpec((None, S, H), lambda b: (b, 0, 0)),
        ),
        compiler_params=_cparams("parallel"),
    )(qkv_bsh, mask_bias)


def _decoder_kernel(x_ref, w_ref, b_ref, o_ref):
    # Tied MLM decoder: x @ word_emb.T + bias, without materializing the transpose.
    y = lax.dot_general(x_ref[...], w_ref[...], (((1,), (1,)), ((), ())),
                        preferred_element_type=jnp.float32)
    o_ref[...] = (y + b_ref[...]).astype(o_ref.dtype)


def decoder(x, emb, bias, tm_cap=256, tv_cap=512):
    """logits = x @ emb.T + bias; x: [T, H] bf16, emb: [V, H] bf16, bias: [V] f32.

    Weight-stationary grid (vocab tiles outer, token tiles inner) so the large
    embedding matrix streams through HBM exactly once. If the vocab has no
    lane-friendly tile divisor (e.g. 30522) it is zero-padded to a multiple of
    tv_cap and the logits are sliced back afterwards.
    """
    T, H = x.shape
    V = emb.shape[0]
    if V <= tv_cap:
        tv, Vp = V, V
    else:
        tv = _col_tile(V, tv_cap)
        if tv == V:                       # no multiple-of-128 divisor: pad vocab
            Vp = -(-V // tv_cap) * tv_cap
            tv = tv_cap
        else:
            Vp = V
    if Vp != V:
        emb = jnp.pad(emb, ((0, Vp - V), (0, 0)))
        bias = jnp.pad(bias, (0, Vp - V))
    tm = _row_tile(T, tm_cap)
    logits = pl.pallas_call(
        _decoder_kernel,
        out_shape=jax.ShapeDtypeStruct((T, Vp), jnp.float32),
        grid_spec=pltpu.PrefetchScalarGridSpec(
            num_scalar_prefetch=0,
            grid=(Vp // tv, T // tm),
            in_specs=[
                pl.BlockSpec((tm, H), lambda j, i: (i, 0)),
                pl.BlockSpec((tv, H), lambda j, i: (j, 0)),
                pl.BlockSpec((1, tv), lambda j, i: (0, j)),
            ],
            out_specs=pl.BlockSpec((tm, tv), lambda j, i: (i, j)),
        ),
        compiler_params=_cparams("parallel", "parallel"),
    )(x, emb, bias.reshape(1, Vp))
    return logits[:, :V] if Vp != V else logits


# ------------------- parameters (synthetic, deterministic) -------------------

def init_params(key, vocab, hidden, num_layers, heads, inter, max_pos=64, type_vocab=2):
    std = 0.02
    wdt = jnp.bfloat16  # MXU-facing weights in bf16; LN params / biases stay f32.

    def nrm(k, shape):
        return (std * jax.random.normal(k, shape, jnp.float32)).astype(wdt)

    keys = iter(jax.random.split(key, 8 + 8 * num_layers))
    p = {
        "vocab": vocab, "hidden": hidden, "heads": heads,
        "word_emb": nrm(next(keys), (vocab, hidden)),
        "pos_emb": nrm(next(keys), (max_pos, hidden)),
        "type_emb": nrm(next(keys), (type_vocab, hidden)),
        "emb_ln_g": jnp.ones((hidden,), jnp.float32),
        "emb_ln_b": jnp.zeros((hidden,), jnp.float32),
        # MLM head (cls.predictions.transform + tied decoder)
        "tr_w": nrm(next(keys), (hidden, hidden)),
        "tr_b": jnp.zeros((hidden,), jnp.float32),
        "tr_ln_g": jnp.ones((hidden,), jnp.float32),
        "tr_ln_b": jnp.zeros((hidden,), jnp.float32),
        "dec_b": jnp.zeros((vocab,), jnp.float32),
        "layers": [],
    }
    for _ in range(num_layers):
        lyr = {
            # fused Q|K|V projection weight, columns [Q | K | V]
            "qkv_w": nrm(next(keys), (hidden, 3 * hidden)),
            "qkv_b": jnp.zeros((3 * hidden,), jnp.float32),
            "o_w": nrm(next(keys), (hidden, hidden)),
            "o_b": jnp.zeros((hidden,), jnp.float32),
            "attn_ln_g": jnp.ones((hidden,), jnp.float32),
            "attn_ln_b": jnp.zeros((hidden,), jnp.float32),
            "i_w": nrm(next(keys), (hidden, inter)),
            "i_b": jnp.zeros((inter,), jnp.float32),
            "fo_w": nrm(next(keys), (inter, hidden)),
            "fo_b": jnp.zeros((hidden,), jnp.float32),
            "out_ln_g": jnp.ones((hidden,), jnp.float32),
            "out_ln_b": jnp.zeros((hidden,), jnp.float32),
        }
        p["layers"].append(lyr)
    return p


# ------------------- forward (BertForMaskedLM .logits) -------------------

def bert_mlm_forward(params, input_ids, token_type_ids, attention_mask):
    B, S = input_ids.shape
    H = params["hidden"]
    nH = params["heads"]
    vocab = params["vocab"]
    T = B * S

    # Embeddings (table gathers are JAX glue; sum in f32, LN inside Pallas)
    x = (params["word_emb"][input_ids].astype(jnp.float32)
         + params["pos_emb"][:S][None, :, :].astype(jnp.float32)
         + params["type_emb"][token_type_ids].astype(jnp.float32))
    x = x.reshape(T, H)
    x = layernorm(x, params["emb_ln_g"], params["emb_ln_b"], out_dtype=jnp.bfloat16)
    # dropout is identity at inference

    # Extended attention mask: (1 - mask) * -10000, shape [B, 1, S]
    mask_bias = ((1.0 - attention_mask.astype(jnp.float32)) * -10000.0)[:, None, :]

    for lyr in params["layers"]:
        qkv = dense(x, lyr["qkv_w"], lyr["qkv_b"])                  # [T, 3H] bf16
        ctx = attention(qkv.reshape(B, S, 3 * H), mask_bias, nH)    # [B, S, H]
        ctx = ctx.reshape(T, H)                                     # free reshape
        x = dense_add_ln(ctx, x, lyr["o_w"], lyr["o_b"],
                         lyr["attn_ln_g"], lyr["attn_ln_b"])
        x = ffn(x, lyr["i_w"], lyr["i_b"], lyr["fo_w"], lyr["fo_b"],
                lyr["out_ln_g"], lyr["out_ln_b"])

    # MLM head: transform (dense + gelu + LN) then tied decoder + bias
    x = dense_ln(x, params["tr_w"], params["tr_b"],
                 params["tr_ln_g"], params["tr_ln_b"], activation="gelu")
    logits = decoder(x, params["word_emb"], params["dec_b"])        # [T, vocab] f32
    return logits.reshape(B, S, vocab)


# TODO(synk): BertTokenizerFast itself (string -> ids) has no Pallas equivalent;
#             the kernels consume already-tokenized integer input_ids.

if __name__ == "__main__":
    # Small config consistent with the module's constructor knobs.
    vocab_size = 96
    hidden_size = 32
    num_layers = 2
    num_heads = 4
    intermediate_size = 64
    B, S = 2, 8

    key = jax.random.PRNGKey(0)
    k_param, k_ids = jax.random.split(key)
    params = init_params(k_param, vocab_size, hidden_size, num_layers,
                         num_heads, intermediate_size, max_pos=64)

    input_ids = jax.random.randint(k_ids, (B, S), 0, vocab_size, dtype=jnp.int32)
    token_type_ids = jnp.zeros((B, S), jnp.int32)
    attention_mask = jnp.ones((B, S), jnp.int32)

    logits = bert_mlm_forward(params, input_ids, token_type_ids, attention_mask)
    logits = jax.block_until_ready(logits)
    assert logits.shape == (B, S, vocab_size)
    assert bool(jnp.all(jnp.isfinite(logits)))
    print("KERNEL_OK")
</pallas_src>

<mosaic_0001>
module attributes {stable_mosaic.version = 11 : i64} {
  func.func @_ln_kernel(%arg0: i32, %arg1: memref<16x32xf32, #tpu.memory_space<vmem>>, %arg2: memref<1x32xf32, #tpu.memory_space<vmem>>, %arg3: memref<1x32xf32, #tpu.memory_space<vmem>>, %arg4: memref<16x32xbf16, #tpu.memory_space<vmem>>) attributes {dimension_semantics = [#tpu.dimension_semantics<parallel>], iteration_bounds = array<i64: 1>, scalar_prefetch = 0 : i64, scratch_operands = 0 : i64, tpu.core_type = #tpu.core_type<tc>, window_params = [{transform_indices = @transform_0, window_bounds = array<i64: 16, 32>}, {pipeline_mode = #tpu.pipeline_mode<synchronous>, transform_indices = @transform_1, window_bounds = array<i64: 1, 32>}, {pipeline_mode = #tpu.pipeline_mode<synchronous>, transform_indices = @transform_2, window_bounds = array<i64: 1, 32>}, {transform_indices = @transform_3, window_bounds = array<i64: 16, 32>}]} {
    %c0 = arith.constant 0 : index
    %c0_0 = arith.constant 0 : index
    %0 = vector.load %arg1[%c0, %c0_0] : memref<16x32xf32, #tpu.memory_space<vmem>>, vector<16x32xf32>
    %c0_1 = arith.constant 0 : index
    %c0_2 = arith.constant 0 : index
    %1 = vector.load %arg2[%c0_1, %c0_2] : memref<1x32xf32, #tpu.memory_space<vmem>>, vector<1x32xf32>
    %c0_3 = arith.constant 0 : index
    %c0_4 = arith.constant 0 : index
    %2 = vector.load %arg3[%c0_3, %c0_4] : memref<1x32xf32, #tpu.memory_space<vmem>>, vector<1x32xf32>
    %cst = arith.constant dense<0.000000e+00> : vector<16xf32>
    %3 = vector.multi_reduction <add>, %0, %cst [1] : vector<16x32xf32> to vector<16xf32>
    %4 = vector.shape_cast %3 : vector<16xf32> to vector<16x1xf32>
    %cst_5 = arith.constant 3.200000e+01 : f32
    %5 = vector.broadcast %cst_5 : f32 to vector<16x1xf32>
    %6 = arith.divf %4, %5 : vector<16x1xf32>
    %7 = vector.broadcast %6 : vector<16x1xf32> to vector<16x32xf32>
    %8 = arith.subf %0, %7 : vector<16x32xf32>
    %9 = arith.mulf %8, %8 : vector<16x32xf32>
    %cst_6 = arith.constant dense<0.000000e+00> : vector<16xf32>
    %10 = vector.multi_reduction <add>, %9, %cst_6 [1] : vector<16x32xf32> to vector<16xf32>
    %11 = vector.shape_cast %10 : vector<16xf32> to vector<16x1xf32>
    %cst_7 = arith.constant 3.200000e+01 : f32
    %12 = vector.broadcast %cst_7 : f32 to vector<16x1xf32>
    %13 = arith.divf %11, %12 : vector<16x1xf32>
    %14 = vector.broadcast %6 : vector<16x1xf32> to vector<16x32xf32>
    %15 = arith.subf %0, %14 : vector<16x32xf32>
    %cst_8 = arith.constant 9.99999996E-13 : f32
    %16 = vector.broadcast %cst_8 : f32 to vector<16x1xf32>
    %17 = arith.addf %13, %16 : vector<16x1xf32>
    %18 = math.rsqrt %17 : vector<16x1xf32>
    %19 = vector.broadcast %18 : vector<16x1xf32> to vector<16x32xf32>
    %20 = arith.mulf %15, %19 : vector<16x32xf32>
    %21 = vector.broadcast %1 : vector<1x32xf32> to vector<16x32xf32>
    %22 = arith.mulf %20, %21 : vector<16x32xf32>
    %23 = vector.broadcast %2 : vector<1x32xf32> to vector<16x32xf32>
    %24 = arith.addf %22, %23 : vector<16x32xf32>
    %25 = arith.truncf %24 : vector<16x32xf32> to vector<16x32xbf16>
    %c0_9 = arith.constant 0 : index
    %c0_10 = arith.constant 0 : index
    %26 = vector.load %arg4[%c0_9, %c0_10] : memref<16x32xbf16, #tpu.memory_space<vmem>>, vector<16x32xbf16>
    tpu.vector_store %arg4[%c0_9, %c0_10], %25 {strides = array<i32>} : memref<16x32xbf16, #tpu.memory_space<vmem>>, vector<16x32xbf16>,
    return
  }
  func.func @transform_0(%arg0: i32) -> (i32, i32) {
    %c0_i32 = arith.constant 0 : i32
    %c0_i32_0 = arith.constant 0 : i32
    return %arg0, %c0_i32 : i32, i32
  }
  func.func @transform_1(%arg0: i32) -> (i32, i32) {
    %c0_i32 = arith.constant 0 : i32
    %c0_i32_0 = arith.constant 0 : i32
    %c0_i32_1 = arith.constant 0 : i32
    return %c0_i32, %c0_i32_0 : i32, i32
  }
  func.func @transform_2(%arg0: i32) -> (i32, i32) {
    %c0_i32 = arith.constant 0 : i32
    %c0_i32_0 = arith.constant 0 : i32
    %c0_i32_1 = arith.constant 0 : i32
    return %c0_i32, %c0_i32_0 : i32, i32
  }
  func.func @transform_3(%arg0: i32) -> (i32, i32) {
    %c0_i32 = arith.constant 0 : i32
    %c0_i32_0 = arith.constant 0 : i32
    return %arg0, %c0_i32 : i32, i32
  }
}

</mosaic_0001>

<llo_original>
// kernel: tpu_custom_call.1
$region0: #{tpu_custom_call.1}
  #allocation0 [shape = 'u32[]', space=smem, size = 0x4, offset = 0x4, fixed_abs, tag = 'smem constant byte address 0x4 - core index']
  #allocation1 [shape = 'u32[144,128]{1,0:T(1,128)}', space=vmem, size = 0x12000, scoped, tag = 'internal scratch']
  %s0 = inlined_call_operand.hbm [shape: f32[16,32], index: 0, kind: input, shape index: {}]
  %s1 = inlined_call_operand.vmem [shape: f32[1,32], index: 1, kind: input, shape index: {}]
  %s2 = inlined_call_operand.vmem [shape: f32[1,32], index: 2, kind: input, shape index: {}]
  %s3 = inlined_call_operand.hbm [shape: bf16[16,32], index: 3, kind: output, shape index: {}]
  %s4 = sld [smem:[#allocation0]]
  $region26: #{tpu_custom_call.1} parent=0
    _
  %s6 = ssub.s32 1, %s4
  %s7 = scalar_select 0, %s6, %s4
  $region1: #{tpu_custom_call.1} parent=0
    #allocation2 [shape = 'u8[8192]{0}', space=vmem, size = 0x2000, scoped, tag = 'input window, operand 0, single buffered']
    #allocation3 [shape = 's32[1]{0}', space=sflag, size = 0x4, scoped, tag = 'scoped memory for tpu_custom_call.1']
    #allocation4 [shape = 's32[1]{0}', space=sflag, size = 0x4, scoped, tag = 'scoped memory for tpu_custom_call.1']
    #allocation5 [shape = 'u8[4096]{0}', space=vmem, size = 0x1000, scoped, tag = 'output window, operand 0, single buffered']
    %8 = vsyncpa [#allocation3], 0
    %9 = vsyncpa [#allocation4], 0
    // Predicated region
    $region2: #{tpu_custom_call.1} parent=1 // pred_check
      _
    $region3: #{tpu_custom_call.1} parent=1 // pred_check_branch
      %11 = sbr.rel (0) target = $region5
    $region4: #{tpu_custom_call.1} parent=1 // pred_region
      %s13 = ssub.s32 256, 256
      %14 = vsyncadd [#allocation3], %s13
      %s15 = sshll.u32 [#allocation2], 4
      %s16 = int_to_ptr.vmem [resolvable:$true] %s15
      %21 = dma.hbm_to_vmem [thread:$0]  %s0, 256, %s16, [#allocation3], 128, 128, 8
    $region5: #{tpu_custom_call.1} parent=1 // pred_fallthru
      _
    // Predicated region
    $region6: #{tpu_custom_call.1} parent=1 // pred_check
      _
    $region7: #{tpu_custom_call.1} parent=1 // pred_check_branch
      %23 = sbr.rel (0) target = $region9
    $region8: #{tpu_custom_call.1} parent=1 // pred_region
      _
    $region9: #{tpu_custom_call.1} parent=1 // pred_fallthru
      _
    // Predicated region
    $region10: #{tpu_custom_call.1} parent=1 // pred_check
      _
    $region11: #{tpu_custom_call.1} parent=1 // pred_check_branch
      %25 = sbr.rel (0) target = $region13
    $region12: #{tpu_custom_call.1} parent=1 // pred_region
      _
    $region13: #{tpu_custom_call.1} parent=1 // pred_fallthru
      _
    // Predicated region
    $region14: #{tpu_custom_call.1} parent=1 // pred_check
      _
    $region15: #{tpu_custom_call.1} parent=1 // pred_check_branch
      %27 = sbr.rel (0) target = $region17
    $region16: #{tpu_custom_call.1} parent=1 // pred_region
      %28 = dma.done [#allocation3], 256
    $region17: #{tpu_custom_call.1} parent=1 // pred_fallthru
      _
    %v29 = vld [vmem:[#allocation2] sm:$0xff]
    %v30 = vld [vmem:[#allocation2 + $0x8] sm:$0xff]
    %v31 = vld [vmem:[%s1] sm:$0x1]
    %v32 = vld [vmem:[%s2] sm:$0x1]
    %vm33 = vcmask 261120
    %v34 = vsel %vm33, %v29, 0.0
    %35 = vadd.xlane.f32.xlu0 %v34
    %v36 = vpop.xlane.xlu0 %35
    %v37 = vsel %vm33, %v30, 0.0
    %38 = vadd.xlane.f32.xlu0 %v37
    %v39 = vpop.xlane.xlu0 %38
    %v40 = vrcp.pop 32.0
    %v41 = vmul.f32 %v36, %v40
    %v42 = vmul.f32 %v39, %v40
    %v43 = vsub.f32 %v29, %v41
    %v44 = vsub.f32 %v30, %v42
    %v45 = vmul.f32 %v43, %v43
    %v46 = vmul.f32 %v44, %v44
    %v47 = vsel %vm33, %v45, 0.0
    %48 = vadd.xlane.f32.xlu0 %v47
    %v49 = vpop.xlane.xlu0 %48
    %v50 = vsel %vm33, %v46, 0.0
    %51 = vadd.xlane.f32.xlu0 %v50
    %v52 = vpop.xlane.xlu0 %51
    %v53 = vmul.f32 %v49, %v40
    %v54 = vmul.f32 %v52, %v40
    %v55 = vadd.f32 %v53, 1e-12
    %v56 = vadd.f32 %v54, 1e-12
    %v57 = vrsqrt.pop %v55
    %v58 = vrsqrt.pop %v56
    %v59 = vmul.f32 %v43, %v57
    %v60 = vmul.f32 %v44, %v58
    %v62 = vlaneseq
    %v63 = vshrl.u32 %v62, 7
    %v64 = vsub.s32 0, %v63
    %v65 = vrot.slane %v31, %v64
    %v67 = vmul.f32 %v59, %v65
    %v68 = vmul.f32 %v60, %v65
    %v70 = vlaneseq
    %v71 = vshrl.u32 %v70, 7
    %v72 = vsub.s32 0, %v71
    %v73 = vrot.slane %v32, %v72
    %v75 = vadd.f32 %v67, %v73
    %v76 = vadd.f32 %v68, %v73
    %v77 = vpack.c.bf16 %v76, %v75
    %v79 = vunpack.c.l.b16 %v77
    %v80 = vunpack.c.h.b16 %v77
    %v81 = vpack.c.b16 %v79, %v79
    %v82 = vpack.c.b16 %v80, %v80
    %vm85 = vcmask 257024
    %86 = vst.msk [vmem:[#allocation5] sm:$0xf] %vm85, %v81
    %87 = vst.msk [vmem:[#allocation5 + $0x4] sm:$0xf] %vm85, %v82
    // Predicated region
    $region18: #{tpu_custom_call.1} parent=1 // pred_check
      _
    $region19: #{tpu_custom_call.1} parent=1 // pred_check_branch
      %89 = sbr.rel (0) target = $region21
    $region20: #{tpu_custom_call.1} parent=1 // pred_region
      %s91 = ssub.s32 128, 128
      %92 = vsyncadd [#allocation4], %s91
      %s93 = sshll.u32 [#allocation5], 4
      %s94 = int_to_ptr.vmem [resolvable:$true] %s93
      %99 = dma.vmem_to_hbm [thread:$0]  %s94, 128, %s3, [#allocation4], 64, 64, 4
    $region21: #{tpu_custom_call.1} parent=1 // pred_fallthru
      _
    // Predicated region
    $region22: #{tpu_custom_call.1} parent=1 // pred_check
      _
    $region23: #{tpu_custom_call.1} parent=1 // pred_check_branch
      %101 = sbr.rel (0) target = $region25
    $region24: #{tpu_custom_call.1} parent=1 // pred_region
      %102 = dma.done [#allocation4], 128
    $region25: #{tpu_custom_call.1} parent=1 // pred_fallthru
      _
    %103 = vsyncpa [#allocation3], 1
    %104 = vsyncpa [#allocation4], 1

</llo_original>
